<compile_context>
chip_gen: v5e
topology: v5e:2x2
jax: 0.10.0
libtpu: 0.0.40
codegen_flags: <defaults>
</compile_context>

<pallas_src>
import math

import jax
import jax.numpy as jnp
import numpy as np
from jax.experimental import pallas as pl
from jax.experimental.pallas import tpu as pltpu

# ---- model dims (small, consistent with the module) ------------------------
B = 2        # batch
S = 8        # sequence length
D = 32       # d_model
H = 4        # num heads
DH = D // H  # head dim
F = 64       # feedforward hidden dim
BS = B * S   # folded batch*sequence rows
EPS = 1e-5


def encoder_layer_kernel(
    x_ref, mask_ref,
    wqkv_ref, bqkv_ref, wo_ref, bo_ref,
    g1_ref, be1_ref, g2_ref, be2_ref,
    w1_ref, b1_ref, w2_ref, b2_ref,
    o_ref,
):
    x = x_ref[...]                                     # (BS, D) fp32

    # ---- fused QKV projection: one (BS,D) x (D,3D) matmul -------------------
    qkv = jnp.dot(x, wqkv_ref[...], preferred_element_type=jnp.float32) + bqkv_ref[...]

    # Block-diagonal additive mask (precomputed in wrapper): rows/cols from
    # different batch elements get -1e30 -> zero softmax weight, so batch stays
    # folded on the sublane axis and one (BS,BS) score matmul per head suffices.
    # TODO(synk): user-provided attention mask support (forward uses mask=None).
    mask_bias = mask_ref[...]                          # (BS, BS)

    # Hoist a single K transpose before the head loop: (BS, D) -> (D, BS).
    # Per-head slices of kT are then sublane-aligned (free) and replace the
    # per-head einsum('id,jd->ij') relayouts.
    kT = qkv[:, D:2 * D].T                             # (D, BS)

    scale = 1.0 / math.sqrt(DH)
    acc = jnp.zeros((BS, D), jnp.float32)
    for h in range(H):                                 # static unroll, H = 4
        q_h = qkv[:, h * DH:(h + 1) * DH]              # (BS, DH)
        kT_h = kT[h * DH:(h + 1) * DH, :]              # (DH, BS) sublane slice
        v_h = qkv[:, 2 * D + h * DH:2 * D + (h + 1) * DH]

        s = jnp.dot(q_h, kT_h,
                    preferred_element_type=jnp.float32) * scale + mask_bias
        m = jnp.max(s, axis=-1, keepdims=True)
        e = jnp.exp(s - m)
        p = e / jnp.sum(e, axis=-1, keepdims=True)     # exact softmax denom
        ctx_h = jnp.dot(p, v_h, preferred_element_type=jnp.float32)   # (BS, DH)

        # Fold the output projection per head instead of concatenating heads:
        # ctx @ Wo == sum_h ctx_h @ Wo[h*DH:(h+1)*DH, :]  (sublane-aligned slice)
        acc = acc + jnp.dot(ctx_h, wo_ref[pl.ds(h * DH, DH), :],
                            preferred_element_type=jnp.float32)
    attn_out = acc + bo_ref[...]

    # ---- residual + LayerNorm (attention) ------------------------------------
    y = x + attn_out
    mu = jnp.mean(y, axis=-1, keepdims=True)
    var = jnp.mean((y - mu) ** 2, axis=-1, keepdims=True)
    y = (y - mu) * jax.lax.rsqrt(var + EPS) * g1_ref[...] + be1_ref[...]

    # ---- feedforward ----------------------------------------------------------
    h1 = jnp.dot(y, w1_ref[...], preferred_element_type=jnp.float32) + b1_ref[...]
    h1 = jnp.maximum(h1, 0.0)
    ff = jnp.dot(h1, w2_ref[...], preferred_element_type=jnp.float32) + b2_ref[...]

    # ---- residual + LayerNorm (feedforward) -----------------------------------
    z = y + ff
    mu2 = jnp.mean(z, axis=-1, keepdims=True)
    var2 = jnp.mean((z - mu2) ** 2, axis=-1, keepdims=True)
    z = (z - mu2) * jax.lax.rsqrt(var2 + EPS) * g2_ref[...] + be2_ref[...]

    o_ref[...] = z


def encoder_layer(x, params):
    """x: (B, S, D) float32. params: dict of weights (already (in, out) layout)."""
    # Fuse QKV weights (wrapper-side, outside the kernel).
    wqkv = jnp.concatenate([params["wq"], params["wk"], params["wv"]], axis=1)  # (D, 3D)
    bqkv = jnp.concatenate([params["bq"], params["bk"], params["bv"]], axis=1)  # (1, 3D)
    xf = x.reshape(BS, D)   # fold batch into sublane rows (free reshape in XLA)

    # Block-diagonal cross-batch mask as a tiny numpy constant (no in-kernel iota).
    idx = np.arange(BS)
    mask_np = np.where((idx[:, None] // S) == (idx[None, :] // S),
                       0.0, -1e30).astype(np.float32)
    mask = jnp.asarray(mask_np)                                          # (BS, BS)

    full = lambda shape: pl.BlockSpec(shape, lambda i: (0,) * len(shape))
    in_specs = [
        full((BS, D)),                                  # x (all batch rows at once)
        full((BS, BS)),                                 # block-diagonal mask bias
        full((D, 3 * D)), full((1, 3 * D)),             # fused Wqkv, bqkv
        full((D, D)), full((1, D)),                     # Wo, bo
        full((1, D)), full((1, D)),                     # gamma1, beta1
        full((1, D)), full((1, D)),                     # gamma2, beta2
        full((D, F)), full((1, F)),                     # W1, b1
        full((F, D)), full((1, D)),                     # W2, b2
    ]
    out = pl.pallas_call(
        encoder_layer_kernel,
        out_shape=jax.ShapeDtypeStruct((BS, D), jnp.float32),
        grid=(1,),                                       # single invocation
        in_specs=in_specs,
        out_specs=full((BS, D)),
        compiler_params=pltpu.CompilerParams(dimension_semantics=("arbitrary",)),
    )(
        xf, mask, wqkv, bqkv, params["wo"], params["bo"],
        params["g1"], params["be1"], params["g2"], params["be2"],
        params["w1"], params["b1"], params["w2"], params["b2"],
    )
    return out.reshape(B, S, D)


# ---- pure-JAX reference (same math) for a correctness check ----------------
def reference(x, p):
    def ln(y, g, b):
        mu = jnp.mean(y, axis=-1, keepdims=True)
        var = jnp.mean((y - mu) ** 2, axis=-1, keepdims=True)
        return (y - mu) / jnp.sqrt(var + EPS) * g + b

    q = x @ p["wq"] + p["bq"]
    k = x @ p["wk"] + p["bk"]
    v = x @ p["wv"] + p["bv"]
    qh = q.reshape(B, S, H, DH).transpose(0, 2, 1, 3)
    kh = k.reshape(B, S, H, DH).transpose(0, 2, 1, 3)
    vh = v.reshape(B, S, H, DH).transpose(0, 2, 1, 3)
    s = jnp.einsum("bhqd,bhkd->bhqk", qh, kh) / math.sqrt(DH)
    pr = jax.nn.softmax(s, axis=-1)
    ctx = jnp.einsum("bhqk,bhkd->bhqd", pr, vh).transpose(0, 2, 1, 3).reshape(B, S, D)
    attn = ctx @ p["wo"] + p["bo"]
    y = ln(x + attn, p["g1"], p["be1"])
    ff = jnp.maximum(y @ p["w1"] + p["b1"], 0.0) @ p["w2"] + p["b2"]
    return ln(y + ff, p["g2"], p["be2"])


if __name__ == "__main__":
    key = jax.random.PRNGKey(0)
    ks = jax.random.split(key, 16)

    def init(k, shape, scale=0.1):
        return jax.random.normal(k, shape, dtype=jnp.float32) * scale

    params = {
        "wq": init(ks[0], (D, D)), "bq": init(ks[1], (1, D)),
        "wk": init(ks[2], (D, D)), "bk": init(ks[3], (1, D)),
        "wv": init(ks[4], (D, D)), "bv": init(ks[5], (1, D)),
        "wo": init(ks[6], (D, D)), "bo": init(ks[7], (1, D)),
        "g1": jnp.ones((1, D), jnp.float32) + init(ks[8], (1, D)),
        "be1": init(ks[9], (1, D)),
        "g2": jnp.ones((1, D), jnp.float32) + init(ks[10], (1, D)),
        "be2": init(ks[11], (1, D)),
        "w1": init(ks[12], (D, F)), "b1": init(ks[13], (1, F)),
        "w2": init(ks[14], (F, D)), "b2": init(ks[15], (1, D)),
    }
    x = jax.random.normal(jax.random.PRNGKey(42), (B, S, D), dtype=jnp.float32)

    out = encoder_layer(x, params)
    out = jax.block_until_ready(out)

    ref = reference(x, params)
    # All f32 math (exact softmax division), so tolerance is tight again.
    np.testing.assert_allclose(np.asarray(out), np.asarray(ref), rtol=1e-4, atol=1e-5)

    print("KERNEL_OK")
</pallas_src>

<mosaic_0001>
module attributes {stable_mosaic.version = 11 : i64} {
  func.func @encoder_layer_kernel(%arg0: i32, %arg1: memref<16x32xf32, #tpu.memory_space<vmem>>, %arg2: memref<16x16xf32, #tpu.memory_space<vmem>>, %arg3: memref<32x96xf32, #tpu.memory_space<vmem>>, %arg4: memref<1x96xf32, #tpu.memory_space<vmem>>, %arg5: memref<32x32xf32, #tpu.memory_space<vmem>>, %arg6: memref<1x32xf32, #tpu.memory_space<vmem>>, %arg7: memref<1x32xf32, #tpu.memory_space<vmem>>, %arg8: memref<1x32xf32, #tpu.memory_space<vmem>>, %arg9: memref<1x32xf32, #tpu.memory_space<vmem>>, %arg10: memref<1x32xf32, #tpu.memory_space<vmem>>, %arg11: memref<32x64xf32, #tpu.memory_space<vmem>>, %arg12: memref<1x64xf32, #tpu.memory_space<vmem>>, %arg13: memref<64x32xf32, #tpu.memory_space<vmem>>, %arg14: memref<1x32xf32, #tpu.memory_space<vmem>>, %arg15: memref<16x32xf32, #tpu.memory_space<vmem>>) attributes {dimension_semantics = [#tpu.dimension_semantics<arbitrary>], iteration_bounds = array<i64: 1>, scalar_prefetch = 0 : i64, scratch_operands = 0 : i64, tpu.core_type = #tpu.core_type<tc>, window_params = [{pipeline_mode = #tpu.pipeline_mode<synchronous>, transform_indices = @transform_0, window_bounds = array<i64: 16, 32>}, {pipeline_mode = #tpu.pipeline_mode<synchronous>, transform_indices = @transform_1, window_bounds = array<i64: 16, 16>}, {pipeline_mode = #tpu.pipeline_mode<synchronous>, transform_indices = @transform_2, window_bounds = array<i64: 32, 96>}, {pipeline_mode = #tpu.pipeline_mode<synchronous>, transform_indices = @transform_3, window_bounds = array<i64: 1, 96>}, {pipeline_mode = #tpu.pipeline_mode<synchronous>, transform_indices = @transform_4, window_bounds = array<i64: 32, 32>}, {pipeline_mode = #tpu.pipeline_mode<synchronous>, transform_indices = @transform_5, window_bounds = array<i64: 1, 32>}, {pipeline_mode = #tpu.pipeline_mode<synchronous>, transform_indices = @transform_6, window_bounds = array<i64: 1, 32>}, {pipeline_mode = #tpu.pipeline_mode<synchronous>, transform_indices = @transform_7, window_bounds = array<i64: 1, 32>}, {pipeline_mode = #tpu.pipeline_mode<synchronous>, transform_indices = @transform_8, window_bounds = array<i64: 1, 32>}, {pipeline_mode = #tpu.pipeline_mode<synchronous>, transform_indices = @transform_9, window_bounds = array<i64: 1, 32>}, {pipeline_mode = #tpu.pipeline_mode<synchronous>, transform_indices = @transform_10, window_bounds = array<i64: 32, 64>}, {pipeline_mode = #tpu.pipeline_mode<synchronous>, transform_indices = @transform_11, window_bounds = array<i64: 1, 64>}, {pipeline_mode = #tpu.pipeline_mode<synchronous>, transform_indices = @transform_12, window_bounds = array<i64: 64, 32>}, {pipeline_mode = #tpu.pipeline_mode<synchronous>, transform_indices = @transform_13, window_bounds = array<i64: 1, 32>}, {pipeline_mode = #tpu.pipeline_mode<synchronous>, transform_indices = @transform_14, window_bounds = array<i64: 16, 32>}]} {
    %c0 = arith.constant 0 : index
    %c0_0 = arith.constant 0 : index
    %0 = vector.load %arg1[%c0, %c0_0] : memref<16x32xf32, #tpu.memory_space<vmem>>, vector<16x32xf32>
    %c0_1 = arith.constant 0 : index
    %c0_2 = arith.constant 0 : index
    %1 = vector.load %arg3[%c0_1, %c0_2] : memref<32x96xf32, #tpu.memory_space<vmem>>, vector<32x96xf32>
    %cst = arith.constant dense<0.000000e+00> : vector<16x96xf32>
    %2 = tpu.matmul %0, %1, %cst {dimension_numbers = #tpu.dot_dimension_numbers<[1], [0], [0], [1], [0, 0, 1, 1], [], []>} : vector<16x32xf32>, vector<32x96xf32>, vector<16x96xf32> -> vector<16x96xf32>
    %c0_3 = arith.constant 0 : index
    %c0_4 = arith.constant 0 : index
    %3 = vector.load %arg4[%c0_3, %c0_4] : memref<1x96xf32, #tpu.memory_space<vmem>>, vector<1x96xf32>
    %4 = vector.broadcast %3 : vector<1x96xf32> to vector<16x96xf32>
    %5 = arith.addf %2, %4 : vector<16x96xf32>
    %c0_5 = arith.constant 0 : index
    %c0_6 = arith.constant 0 : index
    %6 = vector.load %arg2[%c0_5, %c0_6] : memref<16x16xf32, #tpu.memory_space<vmem>>, vector<16x16xf32>
    %7 = vector.extract_strided_slice %5 {offsets = [0, 32], sizes = [16, 32], strides = [1, 1]} : vector<16x96xf32> to vector<16x32xf32>
    %8 = tpu.transpose %7, [1, 0] : vector<16x32xf32> -> vector<32x16xf32>
    %cst_7 = arith.constant 0.000000e+00 : f32
    %9 = vector.broadcast %cst_7 : f32 to vector<16x32xf32>
    %10 = vector.extract_strided_slice %5 {offsets = [0, 0], sizes = [16, 8], strides = [1, 1]} : vector<16x96xf32> to vector<16x8xf32>
    %11 = vector.extract_strided_slice %8 {offsets = [0, 0], sizes = [8, 16], strides = [1, 1]} : vector<32x16xf32> to vector<8x16xf32>
    %12 = vector.extract_strided_slice %5 {offsets = [0, 64], sizes = [16, 8], strides = [1, 1]} : vector<16x96xf32> to vector<16x8xf32>
    %cst_8 = arith.constant dense<0.000000e+00> : vector<16x16xf32>
    %13 = tpu.matmul %10, %11, %cst_8 {dimension_numbers = #tpu.dot_dimension_numbers<[1], [0], [0], [1], [0, 0, 1, 1], [], []>} : vector<16x8xf32>, vector<8x16xf32>, vector<16x16xf32> -> vector<16x16xf32>
    %cst_9 = arith.constant 0.353553385 : f32
    %14 = vector.broadcast %cst_9 : f32 to vector<16x16xf32>
    %15 = arith.mulf %13, %14 : vector<16x16xf32>
    %16 = arith.addf %15, %6 : vector<16x16xf32>
    %cst_10 = arith.constant dense<0xFF800000> : vector<16xf32>
    %17 = vector.multi_reduction <maximumf>, %16, %cst_10 [1] : vector<16x16xf32> to vector<16xf32>
    %18 = vector.shape_cast %17 : vector<16xf32> to vector<16x1xf32>
    %19 = vector.broadcast %18 : vector<16x1xf32> to vector<16x16xf32>
    %20 = arith.subf %16, %19 : vector<16x16xf32>
    %21 = math.exp %20 : vector<16x16xf32>
    %cst_11 = arith.constant dense<0.000000e+00> : vector<16xf32>
    %22 = vector.multi_reduction <add>, %21, %cst_11 [1] : vector<16x16xf32> to vector<16xf32>
    %23 = vector.shape_cast %22 : vector<16xf32> to vector<16x1xf32>
    %24 = vector.broadcast %23 : vector<16x1xf32> to vector<16x16xf32>
    %25 = arith.divf %21, %24 : vector<16x16xf32>
    %cst_12 = arith.constant dense<0.000000e+00> : vector<16x8xf32>
    %26 = tpu.matmul %25, %12, %cst_12 {dimension_numbers = #tpu.dot_dimension_numbers<[1], [0], [0], [1], [0, 0, 1, 1], [], []>} : vector<16x16xf32>, vector<16x8xf32>, vector<16x8xf32> -> vector<16x8xf32>
    %c0_13 = arith.constant 0 : index
    %c0_14 = arith.constant 0 : index
    %27 = vector.load %arg5[%c0_13, %c0_14] : memref<32x32xf32, #tpu.memory_space<vmem>>, vector<8x32xf32>
    %cst_15 = arith.constant dense<0.000000e+00> : vector<16x32xf32>
    %28 = tpu.matmul %26, %27, %cst_15 {dimension_numbers = #tpu.dot_dimension_numbers<[1], [0], [0], [1], [0, 0, 1, 1], [], []>} : vector<16x8xf32>, vector<8x32xf32>, vector<16x32xf32> -> vector<16x32xf32>
    %29 = arith.addf %9, %28 : vector<16x32xf32>
    %30 = vector.extract_strided_slice %5 {offsets = [0, 8], sizes = [16, 8], strides = [1, 1]} : vector<16x96xf32> to vector<16x8xf32>
    %31 = vector.extract_strided_slice %8 {offsets = [8, 0], sizes = [8, 16], strides = [1, 1]} : vector<32x16xf32> to vector<8x16xf32>
    %32 = vector.extract_strided_slice %5 {offsets = [0, 72], sizes = [16, 8], strides = [1, 1]} : vector<16x96xf32> to vector<16x8xf32>
    %cst_16 = arith.constant dense<0.000000e+00> : vector<16x16xf32>
    %33 = tpu.matmul %30, %31, %cst_16 {dimension_numbers = #tpu.dot_dimension_numbers<[1], [0], [0], [1], [0, 0, 1, 1], [], []>} : vector<16x8xf32>, vector<8x16xf32>, vector<16x16xf32> -> vector<16x16xf32>
    %cst_17 = arith.constant 0.353553385 : f32
    %34 = vector.broadcast %cst_17 : f32 to vector<16x16xf32>
    %35 = arith.mulf %33, %34 : vector<16x16xf32>
    %36 = arith.addf %35, %6 : vector<16x16xf32>
    %cst_18 = arith.constant dense<0xFF800000> : vector<16xf32>
    %37 = vector.multi_reduction <maximumf>, %36, %cst_18 [1] : vector<16x16xf32> to vector<16xf32>
    %38 = vector.shape_cast %37 : vector<16xf32> to vector<16x1xf32>
    %39 = vector.broadcast %38 : vector<16x1xf32> to vector<16x16xf32>
    %40 = arith.subf %36, %39 : vector<16x16xf32>
    %41 = math.exp %40 : vector<16x16xf32>
    %cst_19 = arith.constant dense<0.000000e+00> : vector<16xf32>
    %42 = vector.multi_reduction <add>, %41, %cst_19 [1] : vector<16x16xf32> to vector<16xf32>
    %43 = vector.shape_cast %42 : vector<16xf32> to vector<16x1xf32>
    %44 = vector.broadcast %43 : vector<16x1xf32> to vector<16x16xf32>
    %45 = arith.divf %41, %44 : vector<16x16xf32>
    %cst_20 = arith.constant dense<0.000000e+00> : vector<16x8xf32>
    %46 = tpu.matmul %45, %32, %cst_20 {dimension_numbers = #tpu.dot_dimension_numbers<[1], [0], [0], [1], [0, 0, 1, 1], [], []>} : vector<16x16xf32>, vector<16x8xf32>, vector<16x8xf32> -> vector<16x8xf32>
    %c8 = arith.constant 8 : index
    %c0_21 = arith.constant 0 : index
    %47 = vector.load %arg5[%c8, %c0_21] : memref<32x32xf32, #tpu.memory_space<vmem>>, vector<8x32xf32>
    %cst_22 = arith.constant dense<0.000000e+00> : vector<16x32xf32>
    %48 = tpu.matmul %46, %47, %cst_22 {dimension_numbers = #tpu.dot_dimension_numbers<[1], [0], [0], [1], [0, 0, 1, 1], [], []>} : vector<16x8xf32>, vector<8x32xf32>, vector<16x32xf32> -> vector<16x32xf32>
    %49 = arith.addf %29, %48 : vector<16x32xf32>
    %50 = vector.extract_strided_slice %5 {offsets = [0, 16], sizes = [16, 8], strides = [1, 1]} : vector<16x96xf32> to vector<16x8xf32>
    %51 = vector.extract_strided_slice %8 {offsets = [16, 0], sizes = [8, 16], strides = [1, 1]} : vector<32x16xf32> to vector<8x16xf32>
    %52 = vector.extract_strided_slice %5 {offsets = [0, 80], sizes = [16, 8], strides = [1, 1]} : vector<16x96xf32> to vector<16x8xf32>
    %cst_23 = arith.constant dense<0.000000e+00> : vector<16x16xf32>
    %53 = tpu.matmul %50, %51, %cst_23 {dimension_numbers = #tpu.dot_dimension_numbers<[1], [0], [0], [1], [0, 0, 1, 1], [], []>} : vector<16x8xf32>, vector<8x16xf32>, vector<16x16xf32> -> vector<16x16xf32>
    %cst_24 = arith.constant 0.353553385 : f32
    %54 = vector.broadcast %cst_24 : f32 to vector<16x16xf32>
    %55 = arith.mulf %53, %54 : vector<16x16xf32>
    %56 = arith.addf %55, %6 : vector<16x16xf32>
    %cst_25 = arith.constant dense<0xFF800000> : vector<16xf32>
    %57 = vector.multi_reduction <maximumf>, %56, %cst_25 [1] : vector<16x16xf32> to vector<16xf32>
    %58 = vector.shape_cast %57 : vector<16xf32> to vector<16x1xf32>
    %59 = vector.broadcast %58 : vector<16x1xf32> to vector<16x16xf32>
    %60 = arith.subf %56, %59 : vector<16x16xf32>
    %61 = math.exp %60 : vector<16x16xf32>
    %cst_26 = arith.constant dense<0.000000e+00> : vector<16xf32>
    %62 = vector.multi_reduction <add>, %61, %cst_26 [1] : vector<16x16xf32> to vector<16xf32>
    %63 = vector.shape_cast %62 : vector<16xf32> to vector<16x1xf32>
    %64 = vector.broadcast %63 : vector<16x1xf32> to vector<16x16xf32>
    %65 = arith.divf %61, %64 : vector<16x16xf32>
    %cst_27 = arith.constant dense<0.000000e+00> : vector<16x8xf32>
    %66 = tpu.matmul %65, %52, %cst_27 {dimension_numbers = #tpu.dot_dimension_numbers<[1], [0], [0], [1], [0, 0, 1, 1], [], []>} : vector<16x16xf32>, vector<16x8xf32>, vector<16x8xf32> -> vector<16x8xf32>
    %c16 = arith.constant 16 : index
    %c0_28 = arith.constant 0 : index
    %67 = vector.load %arg5[%c16, %c0_28] : memref<32x32xf32, #tpu.memory_space<vmem>>, vector<8x32xf32>
    %cst_29 = arith.constant dense<0.000000e+00> : vector<16x32xf32>
    %68 = tpu.matmul %66, %67, %cst_29 {dimension_numbers = #tpu.dot_dimension_numbers<[1], [0], [0], [1], [0, 0, 1, 1], [], []>} : vector<16x8xf32>, vector<8x32xf32>, vector<16x32xf32> -> vector<16x32xf32>
    %69 = arith.addf %49, %68 : vector<16x32xf32>
    %70 = vector.extract_strided_slice %5 {offsets = [0, 24], sizes = [16, 8], strides = [1, 1]} : vector<16x96xf32> to vector<16x8xf32>
    %71 = vector.extract_strided_slice %8 {offsets = [24, 0], sizes = [8, 16], strides = [1, 1]} : vector<32x16xf32> to vector<8x16xf32>
    %72 = vector.extract_strided_slice %5 {offsets = [0, 88], sizes = [16, 8], strides = [1, 1]} : vector<16x96xf32> to vector<16x8xf32>
    %cst_30 = arith.constant dense<0.000000e+00> : vector<16x16xf32>
    %73 = tpu.matmul %70, %71, %cst_30 {dimension_numbers = #tpu.dot_dimension_numbers<[1], [0], [0], [1], [0, 0, 1, 1], [], []>} : vector<16x8xf32>, vector<8x16xf32>, vector<16x16xf32> -> vector<16x16xf32>
    %cst_31 = arith.constant 0.353553385 : f32
    %74 = vector.broadcast %cst_31 : f32 to vector<16x16xf32>
    %75 = arith.mulf %73, %74 : vector<16x16xf32>
    %76 = arith.addf %75, %6 : vector<16x16xf32>
    %cst_32 = arith.constant dense<0xFF800000> : vector<16xf32>
    %77 = vector.multi_reduction <maximumf>, %76, %cst_32 [1] : vector<16x16xf32> to vector<16xf32>
    %78 = vector.shape_cast %77 : vector<16xf32> to vector<16x1xf32>
    %79 = vector.broadcast %78 : vector<16x1xf32> to vector<16x16xf32>
    %80 = arith.subf %76, %79 : vector<16x16xf32>
    %81 = math.exp %80 : vector<16x16xf32>
    %cst_33 = arith.constant dense<0.000000e+00> : vector<16xf32>
    %82 = vector.multi_reduction <add>, %81, %cst_33 [1] : vector<16x16xf32> to vector<16xf32>
    %83 = vector.shape_cast %82 : vector<16xf32> to vector<16x1xf32>
    %84 = vector.broadcast %83 : vector<16x1xf32> to vector<16x16xf32>
    %85 = arith.divf %81, %84 : vector<16x16xf32>
    %cst_34 = arith.constant dense<0.000000e+00> : vector<16x8xf32>
    %86 = tpu.matmul %85, %72, %cst_34 {dimension_numbers = #tpu.dot_dimension_numbers<[1], [0], [0], [1], [0, 0, 1, 1], [], []>} : vector<16x16xf32>, vector<16x8xf32>, vector<16x8xf32> -> vector<16x8xf32>
    %c24 = arith.constant 24 : index
    %c0_35 = arith.constant 0 : index
    %87 = vector.load %arg5[%c24, %c0_35] : memref<32x32xf32, #tpu.memory_space<vmem>>, vector<8x32xf32>
    %cst_36 = arith.constant dense<0.000000e+00> : vector<16x32xf32>
    %88 = tpu.matmul %86, %87, %cst_36 {dimension_numbers = #tpu.dot_dimension_numbers<[1], [0], [0], [1], [0, 0, 1, 1], [], []>} : vector<16x8xf32>, vector<8x32xf32>, vector<16x32xf32> -> vector<16x32xf32>
    %89 = arith.addf %69, %88 : vector<16x32xf32>
    %c0_37 = arith.constant 0 : index
    %c0_38 = arith.constant 0 : index
    %90 = vector.load %arg6[%c0_37, %c0_38] : memref<1x32xf32, #tpu.memory_space<vmem>>, vector<1x32xf32>
    %91 = vector.broadcast %90 : vector<1x32xf32> to vector<16x32xf32>
    %92 = arith.addf %89, %91 : vector<16x32xf32>
    %93 = arith.addf %0, %92 : vector<16x32xf32>
    %cst_39 = arith.constant dense<0.000000e+00> : vector<16xf32>
    %94 = vector.multi_reduction <add>, %93, %cst_39 [1] : vector<16x32xf32> to vector<16xf32>
    %95 = vector.shape_cast %94 : vector<16xf32> to vector<16x1xf32>
    %cst_40 = arith.constant 3.200000e+01 : f32
    %96 = vector.broadcast %cst_40 : f32 to vector<16x1xf32>
    %97 = arith.divf %95, %96 : vector<16x1xf32>
    %98 = vector.broadcast %97 : vector<16x1xf32> to vector<16x32xf32>
    %99 = arith.subf %93, %98 : vector<16x32xf32>
    %100 = arith.mulf %99, %99 : vector<16x32xf32>
    %cst_41 = arith.constant dense<0.000000e+00> : vector<16xf32>
    %101 = vector.multi_reduction <add>, %100, %cst_41 [1] : vector<16x32xf32> to vector<16xf32>
    %102 = vector.shape_cast %101 : vector<16xf32> to vector<16x1xf32>
    %cst_42 = arith.constant 3.200000e+01 : f32
    %103 = vector.broadcast %cst_42 : f32 to vector<16x1xf32>
    %104 = arith.divf %102, %103 : vector<16x1xf32>
    %105 = vector.broadcast %97 : vector<16x1xf32> to vector<16x32xf32>
    %106 = arith.subf %93, %105 : vector<16x32xf32>
    %cst_43 = arith.constant 9.99999974E-6 : f32
    %107 = vector.broadcast %cst_43 : f32 to vector<16x1xf32>
    %108 = arith.addf %104, %107 : vector<16x1xf32>
    %109 = math.rsqrt %108 : vector<16x1xf32>
    %110 = vector.broadcast %109 : vector<16x1xf32> to vector<16x32xf32>
    %111 = arith.mulf %106, %110 : vector<16x32xf32>
    %c0_44 = arith.constant 0 : index
    %c0_45 = arith.constant 0 : index
    %112 = vector.load %arg7[%c0_44, %c0_45] : memref<1x32xf32, #tpu.memory_space<vmem>>, vector<1x32xf32>
    %113 = vector.broadcast %112 : vector<1x32xf32> to vector<16x32xf32>
    %114 = arith.mulf %111, %113 : vector<16x32xf32>
    %c0_46 = arith.constant 0 : index
    %c0_47 = arith.constant 0 : index
    %115 = vector.load %arg8[%c0_46, %c0_47] : memref<1x32xf32, #tpu.memory_space<vmem>>, vector<1x32xf32>
    %116 = vector.broadcast %115 : vector<1x32xf32> to vector<16x32xf32>
    %117 = arith.addf %114, %116 : vector<16x32xf32>
    %c0_48 = arith.constant 0 : index
    %c0_49 = arith.constant 0 : index
    %118 = vector.load %arg11[%c0_48, %c0_49] : memref<32x64xf32, #tpu.memory_space<vmem>>, vector<32x64xf32>
    %cst_50 = arith.constant dense<0.000000e+00> : vector<16x64xf32>
    %119 = tpu.matmul %117, %118, %cst_50 {dimension_numbers = #tpu.dot_dimension_numbers<[1], [0], [0], [1], [0, 0, 1, 1], [], []>} : vector<16x32xf32>, vector<32x64xf32>, vector<16x64xf32> -> vector<16x64xf32>
    %c0_51 = arith.constant 0 : index
    %c0_52 = arith.constant 0 : index
    %120 = vector.load %arg12[%c0_51, %c0_52] : memref<1x64xf32, #tpu.memory_space<vmem>>, vector<1x64xf32>
    %121 = vector.broadcast %120 : vector<1x64xf32> to vector<16x64xf32>
    %122 = arith.addf %119, %121 : vector<16x64xf32>
    %cst_53 = arith.constant 0.000000e+00 : f32
    %123 = vector.broadcast %cst_53 : f32 to vector<16x64xf32>
    %124 = arith.maximumf %122, %123 : vector<16x64xf32>
    %c0_54 = arith.constant 0 : index
    %c0_55 = arith.constant 0 : index
    %125 = vector.load %arg13[%c0_54, %c0_55] : memref<64x32xf32, #tpu.memory_space<vmem>>, vector<64x32xf32>
    %cst_56 = arith.constant dense<0.000000e+00> : vector<16x32xf32>
    %126 = tpu.matmul %124, %125, %cst_56 {dimension_numbers = #tpu.dot_dimension_numbers<[1], [0], [0], [1], [0, 0, 1, 1], [], []>} : vector<16x64xf32>, vector<64x32xf32>, vector<16x32xf32> -> vector<16x32xf32>
    %c0_57 = arith.constant 0 : index
    %c0_58 = arith.constant 0 : index
    %127 = vector.load %arg14[%c0_57, %c0_58] : memref<1x32xf32, #tpu.memory_space<vmem>>, vector<1x32xf32>
    %128 = vector.broadcast %127 : vector<1x32xf32> to vector<16x32xf32>
    %129 = arith.addf %126, %128 : vector<16x32xf32>
    %130 = arith.addf %117, %129 : vector<16x32xf32>
    %cst_59 = arith.constant dense<0.000000e+00> : vector<16xf32>
    %131 = vector.multi_reduction <add>, %130, %cst_59 [1] : vector<16x32xf32> to vector<16xf32>
    %132 = vector.shape_cast %131 : vector<16xf32> to vector<16x1xf32>
    %cst_60 = arith.constant 3.200000e+01 : f32
    %133 = vector.broadcast %cst_60 : f32 to vector<16x1xf32>
    %134 = arith.divf %132, %133 : vector<16x1xf32>
    %135 = vector.broadcast %134 : vector<16x1xf32> to vector<16x32xf32>
    %136 = arith.subf %130, %135 : vector<16x32xf32>
    %137 = arith.mulf %136, %136 : vector<16x32xf32>
    %cst_61 = arith.constant dense<0.000000e+00> : vector<16xf32>
    %138 = vector.multi_reduction <add>, %137, %cst_61 [1] : vector<16x32xf32> to vector<16xf32>
    %139 = vector.shape_cast %138 : vector<16xf32> to vector<16x1xf32>
    %cst_62 = arith.constant 3.200000e+01 : f32
    %140 = vector.broadcast %cst_62 : f32 to vector<16x1xf32>
    %141 = arith.divf %139, %140 : vector<16x1xf32>
    %142 = vector.broadcast %134 : vector<16x1xf32> to vector<16x32xf32>
    %143 = arith.subf %130, %142 : vector<16x32xf32>
    %cst_63 = arith.constant 9.99999974E-6 : f32
    %144 = vector.broadcast %cst_63 : f32 to vector<16x1xf32>
    %145 = arith.addf %141, %144 : vector<16x1xf32>
    %146 = math.rsqrt %145 : vector<16x1xf32>
    %147 = vector.broadcast %146 : vector<16x1xf32> to vector<16x32xf32>
    %148 = arith.mulf %143, %147 : vector<16x32xf32>
    %c0_64 = arith.constant 0 : index
    %c0_65 = arith.constant 0 : index
    %149 = vector.load %arg9[%c0_64, %c0_65] : memref<1x32xf32, #tpu.memory_space<vmem>>, vector<1x32xf32>
    %150 = vector.broadcast %149 : vector<1x32xf32> to vector<16x32xf32>
    %151 = arith.mulf %148, %150 : vector<16x32xf32>
    %c0_66 = arith.constant 0 : index
    %c0_67 = arith.constant 0 : index
    %152 = vector.load %arg10[%c0_66, %c0_67] : memref<1x32xf32, #tpu.memory_space<vmem>>, vector<1x32xf32>
    %153 = vector.broadcast %152 : vector<1x32xf32> to vector<16x32xf32>
    %154 = arith.addf %151, %153 : vector<16x32xf32>
    %c0_68 = arith.constant 0 : index
    %c0_69 = arith.constant 0 : index
    %155 = vector.load %arg15[%c0_68, %c0_69] : memref<16x32xf32, #tpu.memory_space<vmem>>, vector<16x32xf32>
    tpu.vector_store %arg15[%c0_68, %c0_69], %154 {strides = array<i32>} : memref<16x32xf32, #tpu.memory_space<vmem>>, vector<16x32xf32>,
    return
  }
  func.func @transform_0(%arg0: i32) -> (i32, i32) {
    %c0_i32 = arith.constant 0 : i32
    %c0_i32_0 = arith.constant 0 : i32
    %c0_i32_1 = arith.constant 0 : i32
    return %c0_i32, %c0_i32_0 : i32, i32
  }
  func.func @transform_1(%arg0: i32) -> (i32, i32) {
    %c0_i32 = arith.constant 0 : i32
    %c0_i32_0 = arith.constant 0 : i32
    %c0_i32_1 = arith.constant 0 : i32
    return %c0_i32, %c0_i32_0 : i32, i32
  }
  func.func @transform_2(%arg0: i32) -> (i32, i32) {
    %c0_i32 = arith.constant 0 : i32
    %c0_i32_0 = arith.constant 0 : i32
    %c0_i32_1 = arith.constant 0 : i32
    return %c0_i32, %c0_i32_0 : i32, i32
  }
  func.func @transform_3(%arg0: i32) -> (i32, i32) {
    %c0_i32 = arith.constant 0 : i32
    %c0_i32_0 = arith.constant 0 : i32
    %c0_i32_1 = arith.constant 0 : i32
    return %c0_i32, %c0_i32_0 : i32, i32
  }
  func.func @transform_4(%arg0: i32) -> (i32, i32) {
    %c0_i32 = arith.constant 0 : i32
    %c0_i32_0 = arith.constant 0 : i32
    %c0_i32_1 = arith.constant 0 : i32
    return %c0_i32, %c0_i32_0 : i32, i32
  }
  func.func @transform_5(%arg0: i32) -> (i32, i32) {
    %c0_i32 = arith.constant 0 : i32
    %c0_i32_0 = arith.constant 0 : i32
    %c0_i32_1 = arith.constant 0 : i32
    return %c0_i32, %c0_i32_0 : i32, i32
  }
  func.func @transform_6(%arg0: i32) -> (i32, i32) {
    %c0_i32 = arith.constant 0 : i32
    %c0_i32_0 = arith.constant 0 : i32
    %c0_i32_1 = arith.constant 0 : i32
    return %c0_i32, %c0_i32_0 : i32, i32
  }
  func.func @transform_7(%arg0: i32) -> (i32, i32) {
    %c0_i32 = arith.constant 0 : i32
    %c0_i32_0 = arith.constant 0 : i32
    %c0_i32_1 = arith.constant 0 : i32
    return %c0_i32, %c0_i32_0 : i32, i32
  }
  func.func @transform_8(%arg0: i32) -> (i32, i32) {
    %c0_i32 = arith.constant 0 : i32
    %c0_i32_0 = arith.constant 0 : i32
    %c0_i32_1 = arith.constant 0 : i32
    return %c0_i32, %c0_i32_0 : i32, i32
  }
  func.func @transform_9(%arg0: i32) -> (i32, i32) {
    %c0_i32 = arith.constant 0 : i32
    %c0_i32_0 = arith.constant 0 : i32
    %c0_i32_1 = arith.constant 0 : i32
    return %c0_i32, %c0_i32_0 : i32, i32
  }
  func.func @transform_10(%arg0: i32) -> (i32, i32) {
    %c0_i32 = arith.constant 0 : i32
    %c0_i32_0 = arith.constant 0 : i32
    %c0_i32_1 = arith.constant 0 : i32
    return %c0_i32, %c0_i32_0 : i32, i32
  }
  func.func @transform_11(%arg0: i32) -> (i32, i32) {
    %c0_i32 = arith.constant 0 : i32
    %c0_i32_0 = arith.constant 0 : i32
    %c0_i32_1 = arith.constant 0 : i32
    return %c0_i32, %c0_i32_0 : i32, i32
  }
  func.func @transform_12(%arg0: i32) -> (i32, i32) {
    %c0_i32 = arith.constant 0 : i32
    %c0_i32_0 = arith.constant 0 : i32
    %c0_i32_1 = arith.constant 0 : i32
    return %c0_i32, %c0_i32_0 : i32, i32
  }
  func.func @transform_13(%arg0: i32) -> (i32, i32) {
    %c0_i32 = arith.constant 0 : i32
    %c0_i32_0 = arith.constant 0 : i32
    %c0_i32_1 = arith.constant 0 : i32
    return %c0_i32, %c0_i32_0 : i32, i32
  }
  func.func @transform_14(%arg0: i32) -> (i32, i32) {
    %c0_i32 = arith.constant 0 : i32
    %c0_i32_0 = arith.constant 0 : i32
    %c0_i32_1 = arith.constant 0 : i32
    return %c0_i32, %c0_i32_0 : i32, i32
  }
}

</mosaic_0001>

<llo_original>
// kernel: tpu_custom_call.1
$region0: #{tpu_custom_call.1}
  #allocation0 [shape = 'u32[]', space=smem, size = 0x4, offset = 0x4, fixed_abs, tag = 'smem constant byte address 0x4 - core index']
  #allocation1 [shape = 'u32[72,128]{1,0:T(1,128)}', space=vmem, size = 0x9000, scoped, tag = 'internal scratch']
  %s0 = inlined_call_operand.hbm [shape: f32[16,32], index: 0, kind: input, shape index: {}]
  %s1 = inlined_call_operand.hbm [shape: f32[16,16], index: 1, kind: input, shape index: {}]
  %s2 = inlined_call_operand.vmem [shape: f32[32,96], index: 2, kind: input, shape index: {}]
  %s3 = inlined_call_operand.vmem [shape: f32[1,96], index: 3, kind: input, shape index: {}]
  %s4 = inlined_call_operand.vmem [shape: f32[32,32], index: 4, kind: input, shape index: {}]
  %s5 = inlined_call_operand.vmem [shape: f32[1,32], index: 5, kind: input, shape index: {}]
  %s6 = inlined_call_operand.vmem [shape: f32[1,32], index: 6, kind: input, shape index: {}]
  %s7 = inlined_call_operand.vmem [shape: f32[1,32], index: 7, kind: input, shape index: {}]
  %s8 = inlined_call_operand.vmem [shape: f32[1,32], index: 8, kind: input, shape index: {}]
  %s9 = inlined_call_operand.vmem [shape: f32[1,32], index: 9, kind: input, shape index: {}]
  %s10 = inlined_call_operand.vmem [shape: f32[32,64], index: 10, kind: input, shape index: {}]
  %s11 = inlined_call_operand.vmem [shape: f32[1,64], index: 11, kind: input, shape index: {}]
  %s12 = inlined_call_operand.vmem [shape: f32[64,32], index: 12, kind: input, shape index: {}]
  %s13 = inlined_call_operand.vmem [shape: f32[1,32], index: 13, kind: input, shape index: {}]
  %s14 = inlined_call_operand.hbm [shape: f32[16,32], index: 14, kind: output, shape index: {}]
  %s15 = sld [smem:[#allocation0]]
  $region74: #{tpu_custom_call.1} parent=0
    _
  %s17 = ssub.s32 1, %s15
  %s18 = scalar_select 0, %s17, %s15
  $region1: #{tpu_custom_call.1} parent=0
    #allocation2 [shape = 'u8[8192]{0}', space=vmem, size = 0x2000, scoped, tag = 'input window, operand 0, single buffered']
    #allocation3 [shape = 's32[1]{0}', space=sflag, size = 0x4, scoped, tag = 'scoped memory for tpu_custom_call.1']
    #allocation4 [shape = 's32[1]{0}', space=sflag, size = 0x4, scoped, tag = 'scoped memory for tpu_custom_call.1']
    #allocation5 [shape = 'u8[8192]{0}', space=vmem, size = 0x2000, scoped, tag = 'input window, operand 1, single buffered']
    #allocation6 [shape = 's32[1]{0}', space=sflag, size = 0x4, scoped, tag = 'scoped memory for tpu_custom_call.1']
    #allocation7 [shape = 'u8[8192]{0}', space=vmem, size = 0x2000, scoped, tag = 'output window, operand 0, single buffered']
    %19 = vsyncpa [#allocation3], 0
    %20 = vsyncpa [#allocation6], 0
    %21 = vsyncpa [#allocation4], 0
    // Predicated region
    $region2: #{tpu_custom_call.1} parent=1 // pred_check
      _
    $region3: #{tpu_custom_call.1} parent=1 // pred_check_branch
      %23 = sbr.rel (0) target = $region5
    $region4: #{tpu_custom_call.1} parent=1 // pred_region
      %25 = vsyncadd [#allocation3], 0
      %s26 = sshll.u32 %s0, 4
      %s27 = int_to_ptr.hbm [resolvable:$true] %s26
      %s28 = sshll.u32 [#allocation2], 4
      %s29 = int_to_ptr.vmem [resolvable:$true] %s28
      %34 = dma.hbm_to_vmem [thread:$0]  %s27, 256, %s29, [#allocation3], 128, 128, 8
    $region5: #{tpu_custom_call.1} parent=1 // pred_fallthru
      _
    // Predicated region
    $region6: #{tpu_custom_call.1} parent=1 // pred_check
      _
    $region7: #{tpu_custom_call.1} parent=1 // pred_check_branch
      %36 = sbr.rel (0) target = $region9
    $region8: #{tpu_custom_call.1} parent=1 // pred_region
      %38 = vsyncadd [#allocation6], 0
      %s39 = sshll.u32 %s1, 4
      %s40 = int_to_ptr.hbm [resolvable:$true] %s39
      %s41 = sshll.u32 [#allocation5], 4
      %s42 = int_to_ptr.vmem [resolvable:$true] %s41
      %47 = dma.hbm_to_vmem [thread:$0]  %s40, 256, %s42, [#allocation6], 128, 128, 8
    $region9: #{tpu_custom_call.1} parent=1 // pred_fallthru
      _
    // Predicated region
    $region10: #{tpu_custom_call.1} parent=1 // pred_check
      _
    $region11: #{tpu_custom_call.1} parent=1 // pred_check_branch
      %49 = sbr.rel (0) target = $region13
    $region12: #{tpu_custom_call.1} parent=1 // pred_region
      _
    $region13: #{tpu_custom_call.1} parent=1 // pred_fallthru
      _
    // Predicated region
    $region14: #{tpu_custom_call.1} parent=1 // pred_check
      _
    $region15: #{tpu_custom_call.1} parent=1 // pred_check_branch
      %51 = sbr.rel (0) target = $region17
    $region16: #{tpu_custom_call.1} parent=1 // pred_region
      _
    $region17: #{tpu_custom_call.1} parent=1 // pred_fallthru
      _
    // Predicated region
    $region18: #{tpu_custom_call.1} parent=1 // pred_check
      _
    $region19: #{tpu_custom_call.1} parent=1 // pred_check_branch
      %53 = sbr.rel (0) target = $region21
    $region20: #{tpu_custom_call.1} parent=1 // pred_region
      _
    $region21: #{tpu_custom_call.1} parent=1 // pred_fallthru
      _
    // Predicated region
    $region22: #{tpu_custom_call.1} parent=1 // pred_check
      _
    $region23: #{tpu_custom_call.1} parent=1 // pred_check_branch
      %55 = sbr.rel (0) target = $region25
    $region24: #{tpu_custom_call.1} parent=1 // pred_region
      _
    $region25: #{tpu_custom_call.1} parent=1 // pred_fallthru
      _
    // Predicated region
    $region26: #{tpu_custom_call.1} parent=1 // pred_check
      _
    $region27: #{tpu_custom_call.1} parent=1 // pred_check_branch
      %57 = sbr.rel (0) target = $region29
    $region28: #{tpu_custom_call.1} parent=1 // pred_region
      _
    $region29: #{tpu_custom_call.1} parent=1 // pred_fallthru
      _
    // Predicated region
    $region30: #{tpu_custom_call.1} parent=1 // pred_check
      _
    $region31: #{tpu_custom_call.1} parent=1 // pred_check_branch
      %59 = sbr.rel (0) target = $region33
    $region32: #{tpu_custom_call.1} parent=1 // pred_region
      _
    $region33: #{tpu_custom_call.1} parent=1 // pred_fallthru
      _
    // Predicated region
    $region34: #{tpu_custom_call.1} parent=1 // pred_check
      _
    $region35: #{tpu_custom_call.1} parent=1 // pred_check_branch
      %61 = sbr.rel (0) target = $region37
    $region36: #{tpu_custom_call.1} parent=1 // pred_region
      _
    $region37: #{tpu_custom_call.1} parent=1 // pred_fallthru
      _
    // Predicated region
    $region38: #{tpu_custom_call.1} parent=1 // pred_check
      _
    $region39: #{tpu_custom_call.1} parent=1 // pred_check_branch
      %63 = sbr.rel (0) target = $region41
    $region40: #{tpu_custom_call.1} parent=1 // pred_region
      _
    $region41: #{tpu_custom_call.1} parent=1 // pred_fallthru
      _
    // Predicated region
    $region42: #{tpu_custom_call.1} parent=1 // pred_check
      _
    $region43: #{tpu_custom_call.1} parent=1 // pred_check_branch
      %65 = sbr.rel (0) target = $region45
    $region44: #{tpu_custom_call.1} parent=1 // pred_region
      _
    $region45: #{tpu_custom_call.1} parent=1 // pred_fallthru
      _
    // Predicated region
    $region46: #{tpu_custom_call.1} parent=1 // pred_check
      _
    $region47: #{tpu_custom_call.1} parent=1 // pred_check_branch
      %67 = sbr.rel (0) target = $region49
    $region48: #{tpu_custom_call.1} parent=1 // pred_region
      _
    $region49: #{tpu_custom_call.1} parent=1 // pred_fallthru
      _
    // Predicated region
    $region50: #{tpu_custom_call.1} parent=1 // pred_check
      _
    $region51: #{tpu_custom_call.1} parent=1 // pred_check_branch
      %69 = sbr.rel (0) target = $region53
    $region52: #{tpu_custom_call.1} parent=1 // pred_region
      _
    $region53: #{tpu_custom_call.1} parent=1 // pred_fallthru
      _
    // Predicated region
    $region54: #{tpu_custom_call.1} parent=1 // pred_check
      _
    $region55: #{tpu_custom_call.1} parent=1 // pred_check_branch
      %71 = sbr.rel (0) target = $region57
    $region56: #{tpu_custom_call.1} parent=1 // pred_region
      _
    $region57: #{tpu_custom_call.1} parent=1 // pred_fallthru
      _
    // Predicated region
    $region58: #{tpu_custom_call.1} parent=1 // pred_check
      _
    $region59: #{tpu_custom_call.1} parent=1 // pred_check_branch
      %73 = sbr.rel (0) target = $region61
    $region60: #{tpu_custom_call.1} parent=1 // pred_region
      %75 = dma.done [#allocation3], 256
    $region61: #{tpu_custom_call.1} parent=1 // pred_fallthru
      _
    // Predicated region
    $region62: #{tpu_custom_call.1} parent=1 // pred_check
      _
    $region63: #{tpu_custom_call.1} parent=1 // pred_check_branch
      %77 = sbr.rel (0) target = $region65
    $region64: #{tpu_custom_call.1} parent=1 // pred_region
      %79 = dma.done [#allocation6], 256
    $region65: #{tpu_custom_call.1} parent=1 // pred_fallthru
      _
    %v80 = vld [vmem:[#allocation2] sm:$0xff]
    %v81 = vld [vmem:[#allocation2 + $0x8] sm:$0xff]
    %v82 = vld [vmem:[%s2] sm:$0xff]
    %v83 = vld [vmem:[%s2 + $0x8] sm:$0xff]
    %v84 = vld [vmem:[%s2 + $0x10] sm:$0xff]
    %v85 = vld [vmem:[%s2 + $0x18] sm:$0xff]
    %v86 = vld [vmem:[%s3] sm:$0x1]
    %v88 = vperm.slane %v86, 0
    %vm90 = vcmask 261120
    %v92 = vsel %vm90, %v80, 0
    %v95 = vsel %vm90, %v81, 0
    %97 = vmatpush.msra.mxu0 0.0
    %98 = vmatpush.msra.mxu0 0.0
    %99 = vmatpush.msra.mxu0 0.0
    %100 = vmatpush.msra.mxu0 0.0
    %101 = vmatpush.msra.mxu0 0.0
    %102 = vmatpush.msra.mxu0 0.0
    %103 = vmatpush.msra.mxu0 0.0
    %104 = vmatpush.msra.mxu0 0.0
    %105 = vmatpush.msra.mxu0 0.0
    %106 = vmatpush.msra.mxu0 0.0
    %107 = vmatpush.msra.mxu0 0.0
    %108 = vmatpush.msra.mxu0 0.0
    %109 = vmatpush.msra.mxu0 %v85
    %110 = vmatpush.msra.mxu0 %v84
    %111 = vmatpush.msra.mxu0 %v83
    %112 = vmatpush.msra.mxu0 %v82
    %113 = vmatmul.f32.gmra.mxu0 %v92
    %v114 = vpop.f32.mrf.mxu0
    %v115 = vadd.f32 %v88, %v114
    %116 = vmatmul.f32.gmra.mxu0 %v95
    %v117 = vpop.f32.mrf.mxu0
    %v118 = vadd.f32 %v88, %v117
    %119 = vdwg.mxu0
    %v120 = vld [vmem:[#allocation5] sm:$0xff]
    %v121 = vld [vmem:[#allocation5 + $0x8] sm:$0xff]
    %124 = vrot.lane.b32.xlu0 %v115, 96
    %v125 = vpop.permute.xlu0 %124
    %126 = vrot.lane.b32.xlu0 %v118, 96
    %v127 = vpop.permute.xlu0 %126
    %vm128 = vcmask 64512
    %v129 = vsel %vm128, %v115, 0
    %v131 = vsel %vm128, %v118, 0
    %v133 = vsel %vm128, %v125, 0
    %v135 = vsel %vm128, %v127, 0
    %137 = vmatpush.xpose.msra.mxu0 0.0
    %138 = vmatpush.xpose.msra.mxu0 0.0
    %139 = vmatpush.xpose.msra.mxu0 0.0
    %140 = vmatpush.xpose.msra.mxu0 0.0
    %141 = vmatpush.xpose.msra.mxu0 0.0
    %142 = vmatpush.xpose.msra.mxu0 0.0
    %143 = vmatpush.xpose.msra.mxu0 0.0
    %144 = vmatpush.xpose.msra.mxu0 0.0
    %145 = vmatpush.xpose.msra.mxu0 0.0
    %146 = vmatpush.xpose.msra.mxu0 0.0
    %147 = vmatpush.xpose.msra.mxu0 0.0
    %148 = vmatpush.xpose.msra.mxu0 0.0
    %149 = vmatpush.xpose.msra.mxu0 0.0
    %150 = vmatpush.xpose.msra.mxu0 0.0
    %151 = vmatpush.xpose.msra.mxu0 %v135
    %152 = vmatpush.xpose.msra.mxu0 %v133
    %153 = vmatmul.f32.gmra.mxu0 %v129
    %v154 = vpop.f32.mrf.mxu0
    %v155 = vadd.f32 0.0, %v154
    %156 = vmatmul.f32.gmra.mxu0 %v131
    %v157 = vpop.f32.mrf.mxu0
    %v158 = vadd.f32 0.0, %v157
    %159 = vdwg.mxu0
    %v160 = vmul.f32 %v155, 0.35355338
    %v161 = vmul.f32 %v158, 0.35355338
    %v162 = vadd.f32 %v160, %v120
    %v163 = vadd.f32 %v161, %v121
    %vm164 = vcmask 130048
    %v165 = vsel %vm164, %v162, -inf
    %166 = vmax.xlane.f32.xlu0 %v165
    %v167 = vpop.xlane.xlu0 %166
    %v168 = vsel %vm164, %v163, -inf
    %169 = vmax.xlane.f32.xlu0 %v168
    %v170 = vpop.xlane.xlu0 %169
    %v171 = vsub.f32 %v162, %v167
    %v172 = vsub.f32 %v163, %v170
    %v173 = vmul.f32 %v171, 1.442695
    %v174 = vpow.pop %v173
    %v175 = vmul.f32 %v172, 1.442695
    %v176 = vpow.pop %v175
    %v177 = vsel %vm164, %v174, 0.0
    %178 = vadd.xlane.f32.xlu0 %v177
    %v179 = vpop.xlane.xlu0 %178
    %v180 = vsel %vm164, %v176, 0.0
    %181 = vadd.xlane.f32.xlu0 %v180
    %v182 = vpop.xlane.xlu0 %181
    %v183 = vrcp.pop %v179
    %v184 = vmul.f32 %v179, %v183
    %v185 = vsub.f32 1.0, %v184
    %v186 = vmul.f32 %v183, %v185
    %v187 = vadd.f32 %v183, %v186
    %vm188 = vweird.f32 %v179
    %vm189 = vweird.f32 %v183
    %vm190 = vmor %vm188, %vm189
    %v191 = vsel %vm190, %v183, %v187
    %v192 = vand.u32 2147483647, %v179
    %vm193 = vcmp.eq.f32.partialorder %v192, 8.507059e+37
    %v194 = vand.u32 %v179, 2147483648
    %v195 = vor.u32 1.1754944e-38, %v194
    %v196 = vsel %vm193, %v195, %v191
    %v197 = vmul.f32 %v174, %v196
    %v198 = vrcp.pop %v182
    %v199 = vmul.f32 %v182, %v198
    %v200 = vsub.f32 1.0, %v199
    %v201 = vmul.f32 %v198, %v200
    %v202 = vadd.f32 %v198, %v201
    %vm203 = vweird.f32 %v182
    %vm204 = vweird.f32 %v198
    %vm205 = vmor %vm203, %vm204
    %v206 = vsel %vm205, %v198, %v202
    %v207 = vand.u32 2147483647, %v182
    %vm208 = vcmp.eq.f32.partialorder %v207, 8.507059e+37
    %v209 = vand.u32 %v182, 2147483648
    %v210 = vor.u32 1.1754944e-38, %v209
    %v211 = vsel %vm208, %v210, %v206
    %v212 = vmul.f32 %v176, %v211
    %213 = vrot.lane.b32.xlu0 %v115, 64
    %v214 = vpop.permute.xlu0 %213
    %215 = vrot.lane.b32.xlu0 %v118, 64
    %v216 = vpop.permute.xlu0 %215
    %v220 = vsel %vm164, %v197, 0
    %v223 = vsel %vm164, %v212, 0
    %225 = vmatpush.msra.mxu0 0.0
    %226 = vmatpush.msra.mxu0 0.0
    %227 = vmatpush.msra.mxu0 0.0
    %228 = vmatpush.msra.mxu0 0.0
    %229 = vmatpush.msra.mxu0 0.0
    %230 = vmatpush.msra.mxu0 0.0
    %231 = vmatpush.msra.mxu0 0.0
    %232 = vmatpush.msra.mxu0 0.0
    %233 = vmatpush.msra.mxu0 0.0
    %234 = vmatpush.msra.mxu0 0.0
    %235 = vmatpush.msra.mxu0 0.0
    %236 = vmatpush.msra.mxu0 0.0
    %237 = vmatpush.msra.mxu0 0.0
    %238 = vmatpush.msra.mxu0 0.0
    %239 = vmatpush.msra.mxu0 %v216
    %240 = vmatpush.msra.mxu0 %v214
    %241 = vmatmul.f32.gmra.mxu0 %v220
    %v242 = vpop.f32.mrf.mxu0
    %v243 = vadd.f32 0.0, %v242
    %244 = vmatmul.f32.gmra.mxu0 %v223
    %v245 = vpop.f32.mrf.mxu0
    %v246 = vadd.f32 0.0, %v245
    %247 = vdwg.mxu0
    %v248 = vld [vmem:[%s4] sm:$0xff]
    %249 = vrot.lane.b32.xlu0 %v115, 120
    %v250 = vpop.permute.xlu0 %249
    %251 = vrot.lane.b32.xlu0 %v118, 120
    %v252 = vpop.permute.xlu0 %251
    %253 = vrot.lane.b32.xlu0 %v115, 88
    %v254 = vpop.permute.xlu0 %253
    %255 = vrot.lane.b32.xlu0 %v118, 88
    %v256 = vpop.permute.xlu0 %255
    %v257 = vsel %vm128, %v250, 0
    %v259 = vsel %vm128, %v252, 0
    %v261 = vsel %vm128, %v254, 0
    %v263 = vsel %vm128, %v256, 0
    %265 = vmatpush.xpose.msra.mxu0 0.0
    %266 = vmatpush.xpose.msra.mxu0 0.0
    %267 = vmatpush.xpose.msra.mxu0 0.0
    %268 = vmatpush.xpose.msra.mxu0 0.0
    %269 = vmatpush.xpose.msra.mxu0 0.0
    %270 = vmatpush.xpose.msra.mxu0 0.0
    %271 = vmatpush.xpose.msra.mxu0 0.0
    %272 = vmatpush.xpose.msra.mxu0 0.0
    %273 = vmatpush.xpose.msra.mxu0 0.0
    %274 = vmatpush.xpose.msra.mxu0 0.0
    %275 = vmatpush.xpose.msra.mxu0 0.0
    %276 = vmatpush.xpose.msra.mxu0 0.0
    %277 = vmatpush.xpose.msra.mxu0 0.0
    %278 = vmatpush.xpose.msra.mxu0 0.0
    %279 = vmatpush.xpose.msra.mxu0 %v263
    %280 = vmatpush.xpose.msra.mxu0 %v261
    %281 = vmatmul.f32.gmra.mxu0 %v257
    %v282 = vpop.f32.mrf.mxu0
    %v283 = vadd.f32 0.0, %v282
    %284 = vmatmul.f32.gmra.mxu0 %v259
    %v285 = vpop.f32.mrf.mxu0
    %v286 = vadd.f32 0.0, %v285
    %287 = vdwg.mxu0
    %v288 = vmul.f32 %v283, 0.35355338
    %v289 = vmul.f32 %v286, 0.35355338
    %v290 = vadd.f32 %v288, %v120
    %v291 = vadd.f32 %v289, %v121
    %v292 = vsel %vm164, %v290, -inf
    %293 = vmax.xlane.f32.xlu0 %v292
    %v294 = vpop.xlane.xlu0 %293
    %v295 = vsel %vm164, %v291, -inf
    %296 = vmax.xlane.f32.xlu0 %v295
    %v297 = vpop.xlane.xlu0 %296
    %v298 = vsub.f32 %v290, %v294
    %v299 = vsub.f32 %v291, %v297
    %v300 = vmul.f32 %v298, 1.442695
    %v301 = vpow.pop %v300
    %v302 = vmul.f32 %v299, 1.442695
    %v303 = vpow.pop %v302
    %v304 = vsel %vm164, %v301, 0.0
    %305 = vadd.xlane.f32.xlu0 %v304
    %v306 = vpop.xlane.xlu0 %305
    %v307 = vsel %vm164, %v303, 0.0
    %308 = vadd.xlane.f32.xlu0 %v307
    %v309 = vpop.xlane.xlu0 %308
    %v310 = vrcp.pop %v306
    %v311 = vmul.f32 %v306, %v310
    %v312 = vsub.f32 1.0, %v311
    %v313 = vmul.f32 %v310, %v312
    %v314 = vadd.f32 %v310, %v313
    %vm315 = vweird.f32 %v306
    %vm316 = vweird.f32 %v310
    %vm317 = vmor %vm315, %vm316
    %v318 = vsel %vm317, %v310, %v314
    %v319 = vand.u32 2147483647, %v306
    %vm320 = vcmp.eq.f32.partialorder %v319, 8.507059e+37
    %v321 = vand.u32 %v306, 2147483648
    %v322 = vor.u32 1.1754944e-38, %v321
    %v323 = vsel %vm320, %v322, %v318
    %v324 = vmul.f32 %v301, %v323
    %v325 = vrcp.pop %v309
    %v326 = vmul.f32 %v309, %v325
    %v327 = vsub.f32 1.0, %v326
    %v328 = vmul.f32 %v325, %v327
    %v329 = vadd.f32 %v325, %v328
    %vm330 = vweird.f32 %v309
    %vm331 = vweird.f32 %v325
    %vm332 = vmor %vm330, %vm331
    %v333 = vsel %vm332, %v325, %v329
    %v334 = vand.u32 2147483647, %v309
    %vm335 = vcmp.eq.f32.partialorder %v334, 8.507059e+37
    %v336 = vand.u32 %v309, 2147483648
    %v337 = vor.u32 1.1754944e-38, %v336
    %v338 = vsel %vm335, %v337, %v333
    %v339 = vmul.f32 %v303, %v338
    %340 = vrot.lane.b32.xlu0 %v115, 56
    %v341 = vpop.permute.xlu0 %340
    %342 = vrot.lane.b32.xlu0 %v118, 56
    %v343 = vpop.permute.xlu0 %342
    %v347 = vsel %vm164, %v324, 0
    %v350 = vsel %vm164, %v339, 0
    %352 = vmatpush.msra.mxu0 0.0
    %353 = vmatpush.msra.mxu0 0.0
    %354 = vmatpush.msra.mxu0 0.0
    %355 = vmatpush.msra.mxu0 0.0
    %356 = vmatpush.msra.mxu0 0.0
    %357 = vmatpush.msra.mxu0 0.0
    %358 = vmatpush.msra.mxu0 0.0
    %359 = vmatpush.msra.mxu0 0.0
    %360 = vmatpush.msra.mxu0 0.0
    %361 = vmatpush.msra.mxu0 0.0
    %362 = vmatpush.msra.mxu0 0.0
    %363 = vmatpush.msra.mxu0 0.0
    %364 = vmatpush.msra.mxu0 0.0
    %365 = vmatpush.msra.mxu0 0.0
    %366 = vmatpush.msra.mxu0 %v343
    %367 = vmatpush.msra.mxu0 %v341
    %368 = vmatmul.f32.gmra.mxu0 %v347
    %v369 = vpop.f32.mrf.mxu0
    %v370 = vadd.f32 0.0, %v369
    %371 = vmatmul.f32.gmra.mxu0 %v350
    %v372 = vpop.f32.mrf.mxu0
    %v373 = vadd.f32 0.0, %v372
    %374 = vdwg.mxu0
    %v375 = vld [vmem:[%s4 + $0x8] sm:$0xff]
    %v377 = vsel %vm128, %v370, 0
    %v380 = vsel %vm128, %v373, 0
    %382 = vmatpush.msra.mxu0 0.0
    %383 = vmatpush.msra.mxu0 0.0
    %384 = vmatpush.msra.mxu0 0.0
    %385 = vmatpush.msra.mxu0 0.0
    %386 = vmatpush.msra.mxu0 0.0
    %387 = vmatpush.msra.mxu0 0.0
    %388 = vmatpush.msra.mxu0 0.0
    %389 = vmatpush.msra.mxu0 0.0
    %390 = vmatpush.msra.mxu0 0.0
    %391 = vmatpush.msra.mxu0 0.0
    %392 = vmatpush.msra.mxu0 0.0
    %393 = vmatpush.msra.mxu0 0.0
    %394 = vmatpush.msra.mxu0 0.0
    %395 = vmatpush.msra.mxu0 0.0
    %396 = vmatpush.msra.mxu0 0.0
    %397 = vmatpush.msra.mxu0 %v375
    %398 = vmatmul.f32.gmra.mxu0 %v377
    %v399 = vpop.f32.mrf.mxu0
    %v400 = vadd.f32 0.0, %v399
    %401 = vmatmul.f32.gmra.mxu0 %v380
    %v402 = vpop.f32.mrf.mxu0
    %v403 = vadd.f32 0.0, %v402
    %404 = vdwg.mxu0
    %v406 = vsel %vm128, %v243, 0
    %v409 = vsel %vm128, %v246, 0
    %411 = vmatpush.msra.mxu0 0.0
    %412 = vmatpush.msra.mxu0 0.0
    %413 = vmatpush.msra.mxu0 0.0
    %414 = vmatpush.msra.mxu0 0.0
    %415 = vmatpush.msra.mxu0 0.0
    %416 = vmatpush.msra.mxu0 0.0
    %417 = vmatpush.msra.mxu0 0.0
    %418 = vmatpush.msra.mxu0 0.0
    %419 = vmatpush.msra.mxu0 0.0
    %420 = vmatpush.msra.mxu0 0.0
    %421 = vmatpush.msra.mxu0 0.0
    %422 = vmatpush.msra.mxu0 0.0
    %423 = vmatpush.msra.mxu0 0.0
    %424 = vmatpush.msra.mxu0 0.0
    %425 = vmatpush.msra.mxu0 0.0
    %426 = vmatpush.msra.mxu0 %v248
    %427 = vmatmul.f32.gmra.mxu0 %v406
    %v428 = vpop.f32.mrf.mxu0
    %v429 = vadd.f32 %v400, %v428
    %430 = vmatmul.f32.gmra.mxu0 %v409
    %v431 = vpop.f32.mrf.mxu0
    %v432 = vadd.f32 %v403, %v431
    %433 = vdwg.mxu0
    %434 = vrot.lane.b32.xlu0 %v115, 112
    %v435 = vpop.permute.xlu0 %434
    %436 = vrot.lane.b32.xlu0 %v118, 112
    %v437 = vpop.permute.xlu0 %436
    %438 = vrot.lane.b32.xlu0 %v115, 80
    %v439 = vpop.permute.xlu0 %438
    %440 = vrot.lane.b32.xlu0 %v118, 80
    %v441 = vpop.permute.xlu0 %440
    %v442 = vsel %vm128, %v435, 0
    %v444 = vsel %vm128, %v437, 0
    %v446 = vsel %vm128, %v439, 0
    %v448 = vsel %vm128, %v441, 0
    %450 = vmatpush.xpose.msra.mxu0 0.0
    %451 = vmatpush.xpose.msra.mxu0 0.0
    %452 = vmatpush.xpose.msra.mxu0 0.0
    %453 = vmatpush.xpose.msra.mxu0 0.0
    %454 = vmatpush.xpose.msra.mxu0 0.0
    %455 = vmatpush.xpose.msra.mxu0 0.0
    %456 = vmatpush.xpose.msra.mxu0 0.0
    %457 = vmatpush.xpose.msra.mxu0 0.0
    %458 = vmatpush.xpose.msra.mxu0 0.0
    %459 = vmatpush.xpose.msra.mxu0 0.0
    %460 = vmatpush.xpose.msra.mxu0 0.0
    %461 = vmatpush.xpose.msra.mxu0 0.0
    %462 = vmatpush.xpose.msra.mxu0 0.0
    %463 = vmatpush.xpose.msra.mxu0 0.0
    %464 = vmatpush.xpose.msra.mxu0 %v448
    %465 = vmatpush.xpose.msra.mxu0 %v446
    %466 = vmatmul.f32.gmra.mxu0 %v442
    %v467 = vpop.f32.mrf.mxu0
    %v468 = vadd.f32 0.0, %v467
    %469 = vmatmul.f32.gmra.mxu0 %v444
    %v470 = vpop.f32.mrf.mxu0
    %v471 = vadd.f32 0.0, %v470
    %472 = vdwg.mxu0
    %v473 = vmul.f32 %v468, 0.35355338
    %v474 = vmul.f32 %v471, 0.35355338
    %v475 = vadd.f32 %v473, %v120
    %v476 = vadd.f32 %v474, %v121
    %v477 = vsel %vm164, %v475, -inf
    %478 = vmax.xlane.f32.xlu0 %v477
    %v479 = vpop.xlane.xlu0 %478
    %v480 = vsel %vm164, %v476, -inf
    %481 = vmax.xlane.f32.xlu0 %v480
    %v482 = vpop.xlane.xlu0 %481
    %v483 = vsub.f32 %v475, %v479
    %v484 = vsub.f32 %v476, %v482
    %v485 = vmul.f32 %v483, 1.442695
    %v486 = vpow.pop %v485
    %v487 = vmul.f32 %v484, 1.442695
    %v488 = vpow.pop %v487
    %v489 = vsel %vm164, %v486, 0.0
    %490 = vadd.xlane.f32.xlu0 %v489
    %v491 = vpop.xlane.xlu0 %490
    %v492 = vsel %vm164, %v488, 0.0
    %493 = vadd.xlane.f32.xlu0 %v492
    %v494 = vpop.xlane.xlu0 %493
    %v495 = vrcp.pop %v491
    %v496 = vmul.f32 %v491, %v495
    %v497 = vsub.f32 1.0, %v496
    %v498 = vmul.f32 %v495, %v497
    %v499 = vadd.f32 %v495, %v498
    %vm500 = vweird.f32 %v491
    %vm501 = vweird.f32 %v495
    %vm502 = vmor %vm500, %vm501
    %v503 = vsel %vm502, %v495, %v499
    %v504 = vand.u32 2147483647, %v491
    %vm505 = vcmp.eq.f32.partialorder %v504, 8.507059e+37
    %v506 = vand.u32 %v491, 2147483648
    %v507 = vor.u32 1.1754944e-38, %v506
    %v508 = vsel %vm505, %v507, %v503
    %v509 = vmul.f32 %v486, %v508
    %v510 = vrcp.pop %v494
    %v511 = vmul.f32 %v494, %v510
    %v512 = vsub.f32 1.0, %v511
    %v513 = vmul.f32 %v510, %v512
    %v514 = vadd.f32 %v510, %v513
    %vm515 = vweird.f32 %v494
    %vm516 = vweird.f32 %v510
    %vm517 = vmor %vm515, %vm516
    %v518 = vsel %vm517, %v510, %v514
    %v519 = vand.u32 2147483647, %v494
    %vm520 = vcmp.eq.f32.partialorder %v519, 8.507059e+37
    %v521 = vand.u32 %v494, 2147483648
    %v522 = vor.u32 1.1754944e-38, %v521
    %v523 = vsel %vm520, %v522, %v518
    %v524 = vmul.f32 %v488, %v523
    %525 = vrot.lane.b32.xlu0 %v115, 48
    %v526 = vpop.permute.xlu0 %525
    %527 = vrot.lane.b32.xlu0 %v118, 48
    %v528 = vpop.permute.xlu0 %527
    %v532 = vsel %vm164, %v509, 0
    %v535 = vsel %vm164, %v524, 0
    %537 = vmatpush.msra.mxu0 0.0
    %538 = vmatpush.msra.mxu0 0.0
    %539 = vmatpush.msra.mxu0 0.0
    %540 = vmatpush.msra.mxu0 0.0
    %541 = vmatpush.msra.mxu0 0.0
    %542 = vmatpush.msra.mxu0 0.0
    %543 = vmatpush.msra.mxu0 0.0
    %544 = vmatpush.msra.mxu0 0.0
    %545 = vmatpush.msra.mxu0 0.0
    %546 = vmatpush.msra.mxu0 0.0
    %547 = vmatpush.msra.mxu0 0.0
    %548 = vmatpush.msra.mxu0 0.0
    %549 = vmatpush.msra.mxu0 0.0
    %550 = vmatpush.msra.mxu0 0.0
    %551 = vmatpush.msra.mxu0 %v528
    %552 = vmatpush.msra.mxu0 %v526
    %553 = vmatmul.f32.gmra.mxu0 %v532
    %v554 = vpop.f32.mrf.mxu0
    %v555 = vadd.f32 0.0, %v554
    %556 = vmatmul.f32.gmra.mxu0 %v535
    %v557 = vpop.f32.mrf.mxu0
    %v558 = vadd.f32 0.0, %v557
    %559 = vdwg.mxu0
    %v560 = vld [vmem:[%s4 + $0x10] sm:$0xff]
    %v562 = vsel %vm128, %v555, 0
    %v565 = vsel %vm128, %v558, 0
    %567 = vmatpush.msra.mxu0 0.0
    %568 = vmatpush.msra.mxu0 0.0
    %569 = vmatpush.msra.mxu0 0.0
    %570 = vmatpush.msra.mxu0 0.0
    %571 = vmatpush.msra.mxu0 0.0
    %572 = vmatpush.msra.mxu0 0.0
    %573 = vmatpush.msra.mxu0 0.0
    %574 = vmatpush.msra.mxu0 0.0
    %575 = vmatpush.msra.mxu0 0.0
    %576 = vmatpush.msra.mxu0 0.0
    %577 = vmatpush.msra.mxu0 0.0
    %578 = vmatpush.msra.mxu0 0.0
    %579 = vmatpush.msra.mxu0 0.0
    %580 = vmatpush.msra.mxu0 0.0
    %581 = vmatpush.msra.mxu0 0.0
    %582 = vmatpush.msra.mxu0 %v560
    %583 = vmatmul.f32.gmra.mxu0 %v562
    %v584 = vpop.f32.mrf.mxu0
    %v585 = vadd.f32 0.0, %v584
    %586 = vmatmul.f32.gmra.mxu0 %v565
    %v587 = vpop.f32.mrf.mxu0
    %v588 = vadd.f32 0.0, %v587
    %589 = vdwg.mxu0
    %v590 = vadd.f32 %v429, %v585
    %v591 = vadd.f32 %v432, %v588
    %592 = vrot.lane.b32.xlu0 %v115, 104
    %v593 = vpop.permute.xlu0 %592
    %594 = vrot.lane.b32.xlu0 %v118, 104
    %v595 = vpop.permute.xlu0 %594
    %596 = vrot.lane.b32.xlu0 %v115, 72
    %v597 = vpop.permute.xlu0 %596
    %598 = vrot.lane.b32.xlu0 %v118, 72
    %v599 = vpop.permute.xlu0 %598
    %v600 = vsel %vm128, %v593, 0
    %v602 = vsel %vm128, %v595, 0
    %v604 = vsel %vm128, %v597, 0
    %v606 = vsel %vm128, %v599, 0
    %608 = vmatpush.xpose.msra.mxu0 0.0
    %609 = vmatpush.xpose.msra.mxu0 0.0
    %610 = vmatpush.xpose.msra.mxu0 0.0
    %611 = vmatpush.xpose.msra.mxu0 0.0
    %612 = vmatpush.xpose.msra.mxu0 0.0
    %613 = vmatpush.xpose.msra.mxu0 0.0
    %614 = vmatpush.xpose.msra.mxu0 0.0
    %615 = vmatpush.xpose.msra.mxu0 0.0
    %616 = vmatpush.xpose.msra.mxu0 0.0
    %617 = vmatpush.xpose.msra.mxu0 0.0
    %618 = vmatpush.xpose.msra.mxu0 0.0
    %619 = vmatpush.xpose.msra.mxu0 0.0
    %620 = vmatpush.xpose.msra.mxu0 0.0
    %621 = vmatpush.xpose.msra.mxu0 0.0
    %622 = vmatpush.xpose.msra.mxu0 %v606
    %623 = vmatpush.xpose.msra.mxu0 %v604
    %624 = vmatmul.f32.gmra.mxu0 %v600
    %v625 = vpop.f32.mrf.mxu0
    %v626 = vadd.f32 0.0, %v625
    %627 = vmatmul.f32.gmra.mxu0 %v602
    %v628 = vpop.f32.mrf.mxu0
    %v629 = vadd.f32 0.0, %v628
    %630 = vdwg.mxu0
    %v631 = vmul.f32 %v626, 0.35355338
    %v632 = vmul.f32 %v629, 0.35355338
    %v633 = vadd.f32 %v631, %v120
    %v634 = vadd.f32 %v632, %v121
    %v635 = vsel %vm164, %v633, -inf
    %636 = vmax.xlane.f32.xlu0 %v635
    %v637 = vpop.xlane.xlu0 %636
    %v638 = vsel %vm164, %v634, -inf
    %639 = vmax.xlane.f32.xlu0 %v638
    %v640 = vpop.xlane.xlu0 %639
    %v641 = vsub.f32 %v633, %v637
    %v642 = vsub.f32 %v634, %v640
    %v643 = vmul.f32 %v641, 1.442695
    %v644 = vpow.pop %v643
    %v645 = vmul.f32 %v642, 1.442695
    %v646 = vpow.pop %v645
    %v647 = vsel %vm164, %v644, 0.0
    %648 = vadd.xlane.f32.xlu0 %v647
    %v649 = vpop.xlane.xlu0 %648
    %v650 = vsel %vm164, %v646, 0.0
    %651 = vadd.xlane.f32.xlu0 %v650
    %v652 = vpop.xlane.xlu0 %651
    %v653 = vrcp.pop %v649
    %v654 = vmul.f32 %v649, %v653
    %v655 = vsub.f32 1.0, %v654
    %v656 = vmul.f32 %v653, %v655
    %v657 = vadd.f32 %v653, %v656
    %vm658 = vweird.f32 %v649
    %vm659 = vweird.f32 %v653
    %vm660 = vmor %vm658, %vm659
    %v661 = vsel %vm660, %v653, %v657
    %v662 = vand.u32 2147483647, %v649
    %vm663 = vcmp.eq.f32.partialorder %v662, 8.507059e+37
    %v664 = vand.u32 %v649, 2147483648
    %v665 = vor.u32 1.1754944e-38, %v664
    %v666 = vsel %vm663, %v665, %v661
    %v667 = vmul.f32 %v644, %v666
    %v668 = vrcp.pop %v652
    %v669 = vmul.f32 %v652, %v668
    %v670 = vsub.f32 1.0, %v669
    %v671 = vmul.f32 %v668, %v670
    %v672 = vadd.f32 %v668, %v671
    %vm673 = vweird.f32 %v652
    %vm674 = vweird.f32 %v668
    %vm675 = vmor %vm673, %vm674
    %v676 = vsel %vm675, %v668, %v672
    %v677 = vand.u32 2147483647, %v652
    %vm678 = vcmp.eq.f32.partialorder %v677, 8.507059e+37
    %v679 = vand.u32 %v652, 2147483648
    %v680 = vor.u32 1.1754944e-38, %v679
    %v681 = vsel %vm678, %v680, %v676
    %v682 = vmul.f32 %v646, %v681
    %683 = vrot.lane.b32.xlu0 %v115, 40
    %v684 = vpop.permute.xlu0 %683
    %685 = vrot.lane.b32.xlu0 %v118, 40
    %v686 = vpop.permute.xlu0 %685
    %v690 = vsel %vm164, %v667, 0
    %v693 = vsel %vm164, %v682, 0
    %695 = vmatpush.msra.mxu0 0.0
    %696 = vmatpush.msra.mxu0 0.0
    %697 = vmatpush.msra.mxu0 0.0
    %698 = vmatpush.msra.mxu0 0.0
    %699 = vmatpush.msra.mxu0 0.0
    %700 = vmatpush.msra.mxu0 0.0
    %701 = vmatpush.msra.mxu0 0.0
    %702 = vmatpush.msra.mxu0 0.0
    %703 = vmatpush.msra.mxu0 0.0
    %704 = vmatpush.msra.mxu0 0.0
    %705 = vmatpush.msra.mxu0 0.0
    %706 = vmatpush.msra.mxu0 0.0
    %707 = vmatpush.msra.mxu0 0.0
    %708 = vmatpush.msra.mxu0 0.0
    %709 = vmatpush.msra.mxu0 %v686
    %710 = vmatpush.msra.mxu0 %v684
    %711 = vmatmul.f32.gmra.mxu0 %v690
    %v712 = vpop.f32.mrf.mxu0
    %v713 = vadd.f32 0.0, %v712
    %714 = vmatmul.f32.gmra.mxu0 %v693
    %v715 = vpop.f32.mrf.mxu0
    %v716 = vadd.f32 0.0, %v715
    %717 = vdwg.mxu0
    %v718 = vld [vmem:[%s4 + $0x18] sm:$0xff]
    %v720 = vsel %vm128, %v713, 0
    %v723 = vsel %vm128, %v716, 0
    %725 = vmatpush.msra.mxu0 0.0
    %726 = vmatpush.msra.mxu0 0.0
    %727 = vmatpush.msra.mxu0 0.0
    %728 = vmatpush.msra.mxu0 0.0
    %729 = vmatpush.msra.mxu0 0.0
    %730 = vmatpush.msra.mxu0 0.0
    %731 = vmatpush.msra.mxu0 0.0
    %732 = vmatpush.msra.mxu0 0.0
    %733 = vmatpush.msra.mxu0 0.0
    %734 = vmatpush.msra.mxu0 0.0
    %735 = vmatpush.msra.mxu0 0.0
    %736 = vmatpush.msra.mxu0 0.0
    %737 = vmatpush.msra.mxu0 0.0
    %738 = vmatpush.msra.mxu0 0.0
    %739 = vmatpush.msra.mxu0 0.0
    %740 = vmatpush.msra.mxu0 %v718
    %741 = vmatmul.f32.gmra.mxu0 %v720
    %v742 = vpop.f32.mrf.mxu0
    %v743 = vadd.f32 0.0, %v742
    %744 = vmatmul.f32.gmra.mxu0 %v723
    %v745 = vpop.f32.mrf.mxu0
    %v746 = vadd.f32 0.0, %v745
    %747 = vdwg.mxu0
    %v748 = vadd.f32 %v590, %v743
    %v749 = vadd.f32 %v591, %v746
    %v750 = vld [vmem:[%s5] sm:$0x1]
    %v752 = vperm.slane %v750, 0
    %v754 = vadd.f32 %v748, %v752
    %v755 = vadd.f32 %v749, %v752
    %v756 = vadd.f32 %v80, %v754
    %v757 = vadd.f32 %v81, %v755
    %v758 = vsel %vm90, %v756, 0.0
    %759 = vadd.xlane.f32.xlu0 %v758
    %v760 = vpop.xlane.xlu0 %759
    %v761 = vsel %vm90, %v757, 0.0
    %762 = vadd.xlane.f32.xlu0 %v761
    %v763 = vpop.xlane.xlu0 %762
    %v764 = vrcp.pop 32.0
    %v765 = vmul.f32 32.0, %v764
    %v766 = vsub.f32 1.0, %v765
    %v767 = vmul.f32 %v764, %v766
    %v768 = vadd.f32 %v764, %v767
    %vm769 = vweird.f32 %v764
    %v770 = vsel %vm769, %v764, %v768
    %v771 = vmul.f32 %v760, %v770
    %v772 = vmul.f32 %v763, %v770
    %v773 = vsub.f32 %v756, %v771
    %v774 = vsub.f32 %v757, %v772
    %v775 = vmul.f32 %v773, %v773
    %v776 = vmul.f32 %v774, %v774
    %v777 = vsel %vm90, %v775, 0.0
    %778 = vadd.xlane.f32.xlu0 %v777
    %v779 = vpop.xlane.xlu0 %778
    %v780 = vsel %vm90, %v776, 0.0
    %781 = vadd.xlane.f32.xlu0 %v780
    %v782 = vpop.xlane.xlu0 %781
    %v783 = vmul.f32 %v779, %v770
    %v784 = vmul.f32 %v782, %v770
    %v785 = vadd.f32 %v783, 1e-05
    %v786 = vadd.f32 %v784, 1e-05
    %v787 = vrsqrt.pop %v785
    %v788 = vmul.f32 %v787, %v785
    %v789 = vmul.f32 %v788, %v787
    %v790 = vmul.f32 0.5, %v789
    %v791 = vsub.f32 1.5, %v790
    %v792 = vmul.f32 %v787, %v791
    %vm793 = vweird.f32 %v785
    %vm794 = vweird.f32 %v787
    %vm795 = vmor %vm793, %vm794
    %v796 = vsel %vm795, %v787, %v792
    %v797 = vrsqrt.pop %v786
    %v798 = vmul.f32 %v797, %v786
    %v799 = vmul.f32 %v798, %v797
    %v800 = vmul.f32 0.5, %v799
    %v801 = vsub.f32 1.5, %v800
    %v802 = vmul.f32 %v797, %v801
    %vm803 = vweird.f32 %v786
    %vm804 = vweird.f32 %v797
    %vm805 = vmor %vm803, %vm804
    %v806 = vsel %vm805, %v797, %v802
    %v807 = vmul.f32 %v773, %v796
    %v808 = vmul.f32 %v774, %v806
    %v809 = vld [vmem:[%s6] sm:$0x1]
    %v811 = vperm.slane %v809, 0
    %v813 = vmul.f32 %v807, %v811
    %v814 = vmul.f32 %v808, %v811
    %v815 = vld [vmem:[%s7] sm:$0x1]
    %v817 = vperm.slane %v815, 0
    %v819 = vadd.f32 %v813, %v817
    %v820 = vadd.f32 %v814, %v817
    %v821 = vld [vmem:[%s10] sm:$0xff]
    %v822 = vld [vmem:[%s10 + $0x8] sm:$0xff]
    %v823 = vld [vmem:[%s10 + $0x10] sm:$0xff]
    %v824 = vld [vmem:[%s10 + $0x18] sm:$0xff]
    %v825 = vld [vmem:[%s11] sm:$0x1]
    %v827 = vperm.slane %v825, 0
    %v830 = vsel %vm90, %v819, 0
    %v833 = vsel %vm90, %v820, 0
    %835 = vmatpush.msra.mxu0 0.0
    %836 = vmatpush.msra.mxu0 0.0
    %837 = vmatpush.msra.mxu0 0.0
    %838 = vmatpush.msra.mxu0 0.0
    %839 = vmatpush.msra.mxu0 0.0
    %840 = vmatpush.msra.mxu0 0.0
    %841 = vmatpush.msra.mxu0 0.0
    %842 = vmatpush.msra.mxu0 0.0
    %843 = vmatpush.msra.mxu0 0.0
    %844 = vmatpush.msra.mxu0 0.0
    %845 = vmatpush.msra.mxu0 0.0
    %846 = vmatpush.msra.mxu0 0.0
    %847 = vmatpush.msra.mxu0 %v824
    %848 = vmatpush.msra.mxu0 %v823
    %849 = vmatpush.msra.mxu0 %v822
    %850 = vmatpush.msra.mxu0 %v821
    %851 = vmatmul.f32.gmra.mxu0 %v830
    %v852 = vpop.f32.mrf.mxu0
    %v853 = vadd.f32 %v827, %v852
    %854 = vmatmul.f32.gmra.mxu0 %v833
    %v855 = vpop.f32.mrf.mxu0
    %v856 = vadd.f32 %v827, %v855
    %857 = vdwg.mxu0
    %v858 = vmax.f32 %v853, 0.0
    %v859 = vmax.f32 %v856, 0.0
    %v860 = vld [vmem:[%s12] sm:$0xff]
    %v861 = vld [vmem:[%s12 + $0x8] sm:$0xff]
    %v862 = vld [vmem:[%s12 + $0x10] sm:$0xff]
    %v863 = vld [vmem:[%s12 + $0x18] sm:$0xff]
    %v864 = vld [vmem:[%s12 + $0x20] sm:$0xff]
    %v865 = vld [vmem:[%s12 + $0x28] sm:$0xff]
    %v866 = vld [vmem:[%s12 + $0x30] sm:$0xff]
    %v867 = vld [vmem:[%s12 + $0x38] sm:$0xff]
    %v868 = vld [vmem:[%s13] sm:$0x1]
    %v870 = vperm.slane %v868, 0
    %vm872 = vcmask 523264
    %v874 = vsel %vm872, %v858, 0
    %v877 = vsel %vm872, %v859, 0
    %879 = vmatpush.msra.mxu0 0.0
    %880 = vmatpush.msra.mxu0 0.0
    %881 = vmatpush.msra.mxu0 0.0
    %882 = vmatpush.msra.mxu0 0.0
    %883 = vmatpush.msra.mxu0 0.0
    %884 = vmatpush.msra.mxu0 0.0
    %885 = vmatpush.msra.mxu0 0.0
    %886 = vmatpush.msra.mxu0 0.0
    %887 = vmatpush.msra.mxu0 %v867
    %888 = vmatpush.msra.mxu0 %v866
    %889 = vmatpush.msra.mxu0 %v865
    %890 = vmatpush.msra.mxu0 %v864
    %891 = vmatpush.msra.mxu0 %v863
    %892 = vmatpush.msra.mxu0 %v862
    %893 = vmatpush.msra.mxu0 %v861
    %894 = vmatpush.msra.mxu0 %v860
    %895 = vmatmul.f32.gmra.mxu0 %v874
    %v896 = vpop.f32.mrf.mxu0
    %v897 = vadd.f32 %v870, %v896
    %898 = vmatmul.f32.gmra.mxu0 %v877
    %v899 = vpop.f32.mrf.mxu0
    %v900 = vadd.f32 %v870, %v899
    %901 = vdwg.mxu0
    %v902 = vadd.f32 %v819, %v897
    %v903 = vadd.f32 %v820, %v900
    %v904 = vsel %vm90, %v902, 0.0
    %905 = vadd.xlane.f32.xlu0 %v904
    %v906 = vpop.xlane.xlu0 %905
    %v907 = vsel %vm90, %v903, 0.0
    %908 = vadd.xlane.f32.xlu0 %v907
    %v909 = vpop.xlane.xlu0 %908
    %v910 = vmul.f32 %v906, %v770
    %v911 = vmul.f32 %v909, %v770
    %v912 = vsub.f32 %v902, %v910
    %v913 = vsub.f32 %v903, %v911
    %v914 = vmul.f32 %v912, %v912
    %v915 = vmul.f32 %v913, %v913
    %v916 = vsel %vm90, %v914, 0.0
    %917 = vadd.xlane.f32.xlu0 %v916
    %v918 = vpop.xlane.xlu0 %917
    %v919 = vsel %vm90, %v915, 0.0
    %920 = vadd.xlane.f32.xlu0 %v919
    %v921 = vpop.xlane.xlu0 %920
    %v922 = vmul.f32 %v918, %v770
    %v923 = vmul.f32 %v921, %v770
    %v924 = vadd.f32 %v922, 1e-05
    %v925 = vadd.f32 %v923, 1e-05
    %v926 = vrsqrt.pop %v924
    %v927 = vmul.f32 %v926, %v924
    %v928 = vmul.f32 %v927, %v926
    %v929 = vmul.f32 0.5, %v928
    %v930 = vsub.f32 1.5, %v929
    %v931 = vmul.f32 %v926, %v930
    %vm932 = vweird.f32 %v924
    %vm933 = vweird.f32 %v926
    %vm934 = vmor %vm932, %vm933
    %v935 = vsel %vm934, %v926, %v931
    %v936 = vrsqrt.pop %v925
    %v937 = vmul.f32 %v936, %v925
    %v938 = vmul.f32 %v937, %v936
    %v939 = vmul.f32 0.5, %v938
    %v940 = vsub.f32 1.5, %v939
    %v941 = vmul.f32 %v936, %v940
    %vm942 = vweird.f32 %v925
    %vm943 = vweird.f32 %v936
    %vm944 = vmor %vm942, %vm943
    %v945 = vsel %vm944, %v936, %v941
    %v946 = vmul.f32 %v912, %v935
    %v947 = vmul.f32 %v913, %v945
    %v948 = vld [vmem:[%s8] sm:$0x1]
    %v950 = vperm.slane %v948, 0
    %v952 = vmul.f32 %v946, %v950
    %v953 = vmul.f32 %v947, %v950
    %v954 = vld [vmem:[%s9] sm:$0x1]
    %v956 = vperm.slane %v954, 0
    %v958 = vadd.f32 %v952, %v956
    %v959 = vadd.f32 %v953, %v956
    %960 = vst.msk [vmem:[#allocation7] sm:$0xff] %vm90, %v958
    %961 = vst.msk [vmem:[#allocation7 + $0x8] sm:$0xff] %vm90, %v959
    // Predicated region
    $region66: #{tpu_custom_call.1} parent=1 // pred_check
      _
    $region67: #{tpu_custom_call.1} parent=1 // pred_check_branch
      %963 = sbr.rel (0) target = $region69
    $region68: #{tpu_custom_call.1} parent=1 // pred_region
      %965 = vsyncadd [#allocation4], 0
      %s966 = sshll.u32 [#allocation7], 4
      %s967 = int_to_ptr.vmem [resolvable:$true] %s966
      %s968 = sshll.u32 %s14, 4
      %s969 = int_to_ptr.hbm [resolvable:$true] %s968
      %974 = dma.vmem_to_hbm [thread:$0]  %s967, 256, %s969, [#allocation4], 128, 128, 8
    $region69: #{tpu_custom_call.1} parent=1 // pred_fallthru
      _
    // Predicated region
    $region70: #{tpu_custom_call.1} parent=1 // pred_check
      _
    $region71: #{tpu_custom_call.1} parent=1 // pred_check_branch
      %976 = sbr.rel (0) target = $region73
    $region72: #{tpu_custom_call.1} parent=1 // pred_region
      %978 = dma.done [#allocation4], 256
    $region73: #{tpu_custom_call.1} parent=1 // pred_fallthru
      _
    %979 = vsyncpa [#allocation3], 1
    %980 = vsyncpa [#allocation6], 1
    %981 = vsyncpa [#allocation4], 1

</llo_original>
